<compile_context>
chip_gen: v7x
topology: tpu7x:2x2x1
jax: 0.10.0
libtpu: 0.0.40
codegen_flags: <defaults>
</compile_context>

<pallas_src>
import jax
import jax.numpy as jnp
from jax.experimental import pallas as pl
from jax.experimental.pallas import tpu as pltpu


def _stacked_gru_kernel(x_ref, h0_ref, wih_ref, whh_ref, bx_ref, bhn_ref,
                        h1_ref, x_scratch):
    """One grid step == one GRU layer.

    x_ref    : (B, Dpad)    layer-0 input (zero-padded to Dpad), read at l==0
    h0_ref   : (B, H)       this layer's previous hidden state
    wih_ref  : (Dpad, 3H)   weight_ih.T, zero-padded rows, bf16
    whh_ref  : (H, 3H)      weight_hh.T, bf16
    bx_ref   : (1, 3H)      [b_ih_r+b_hh_r, b_ih_z+b_hh_z, b_ih_n]   (f32)
    bhn_ref  : (1, H)       b_hh_n                                    (f32)
    h1_ref   : (B, H)       this layer's new hidden state (output)
    x_scratch: (B, Dpad)    persistent VMEM: running activation across layers
    """
    layer = pl.program_id(0)
    hidden = h0_ref.shape[-1]
    cdt = wih_ref.dtype  # compute dtype for MXU operands (bf16)

    @pl.when(layer == 0)
    def _():
        x_scratch[...] = x_ref[...].astype(jnp.float32)

    x = x_scratch[...]
    h = h0_ref[...].astype(jnp.float32)

    # MXU matmuls: bf16 operands, f32 accumulation.
    gi = jnp.dot(x.astype(cdt), wih_ref[...],
                 preferred_element_type=jnp.float32) + bx_ref[...]
    gh = jnp.dot(h.astype(cdt), whh_ref[...],
                 preferred_element_type=jnp.float32)

    # Gate order matches PyTorch GRUCell: [r, z, n].
    i_r = gi[:, 0 * hidden:1 * hidden]
    i_z = gi[:, 1 * hidden:2 * hidden]
    i_n = gi[:, 2 * hidden:3 * hidden]
    h_r = gh[:, 0 * hidden:1 * hidden]
    h_z = gh[:, 1 * hidden:2 * hidden]
    h_n = gh[:, 2 * hidden:3 * hidden]

    r = jax.nn.sigmoid(i_r + h_r)
    z = jax.nn.sigmoid(i_z + h_z)
    n = jnp.tanh(i_n + r * (h_n + bhn_ref[...]))
    h_new = (1.0 - z) * n + z * h

    h1_ref[...] = h_new.astype(h1_ref.dtype)
    # Carry activation to the next layer in VMEM.  Columns >= H keep stale
    # data, but the corresponding weight rows for layers > 0 are zero.
    x_scratch[:, 0:hidden] = h_new


def _stacked_gru_forward(x_pad, hidden, w_ih, w_hh, b_x, b_hn):
    """Fused stacked-GRU forward.  x_pad: (B, Dpad); hidden: (L, B, H)."""
    num_layers, batch, rnn_size = hidden.shape
    d_pad = x_pad.shape[1]
    three_h = 3 * rnn_size

    h_1 = pl.pallas_call(
        _stacked_gru_kernel,
        out_shape=jax.ShapeDtypeStruct((num_layers, batch, rnn_size),
                                       x_pad.dtype),
        grid=(num_layers,),
        in_specs=[
            pl.BlockSpec((batch, d_pad), lambda l: (0, 0)),
            pl.BlockSpec((None, batch, rnn_size), lambda l: (l, 0, 0)),
            pl.BlockSpec((None, d_pad, three_h), lambda l: (l, 0, 0)),
            pl.BlockSpec((None, rnn_size, three_h), lambda l: (l, 0, 0)),
            pl.BlockSpec((None, 1, three_h), lambda l: (l, 0, 0)),
            pl.BlockSpec((None, 1, rnn_size), lambda l: (l, 0, 0)),
        ],
        out_specs=pl.BlockSpec((None, batch, rnn_size), lambda l: (l, 0, 0)),
        scratch_shapes=[pltpu.VMEM((batch, d_pad), jnp.float32)],
        compiler_params=pltpu.CompilerParams(
            # Layer axis carries a data dependence through the scratch.
            dimension_semantics=("arbitrary",),
            # NOTE: for large H, raise vmem_limit_bytes on v5e/v6e (128 MiB
            # physical) to keep more resident; per-layer streaming above is
            # what keeps v7x (64 MiB) safe without further tiling.
        ),
    )(x_pad, hidden, w_ih, w_hh, b_x, b_hn)

    out = h_1[-1]
    return out, h_1


_stacked_gru_forward_jit = jax.jit(_stacked_gru_forward)


class StackedGRU:
    """JAX/Pallas port of the PyTorch StackedGRU module (inference)."""

    def __init__(self, num_layers, input_size, rnn_size, dropout, key,
                 compute_dtype=jnp.bfloat16):
        self.num_layers = num_layers
        self.input_size = input_size
        self.rnn_size = rnn_size
        self.dropout = dropout  # nn.Dropout is identity in eval mode
        self.d_pad = max(input_size, rnn_size)

        H = rnn_size
        bound = 1.0 / float(H) ** 0.5
        w_ih_l, w_hh_l, b_x_l, b_hn_l = [], [], [], []
        in_sz = input_size
        for _ in range(num_layers):
            key, k1, k2, k3, k4 = jax.random.split(key, 5)
            # PyTorch GRUCell param shapes/init: weight_ih (3H, in),
            # weight_hh (3H, H), bias_ih (3H,), bias_hh (3H,),
            # uniform(-1/sqrt(H), 1/sqrt(H)).
            w_ih = jax.random.uniform(k1, (3 * H, in_sz), minval=-bound,
                                      maxval=bound, dtype=jnp.float32)
            w_hh = jax.random.uniform(k2, (3 * H, H), minval=-bound,
                                      maxval=bound, dtype=jnp.float32)
            b_ih = jax.random.uniform(k3, (3 * H,), minval=-bound,
                                      maxval=bound, dtype=jnp.float32)
            b_hh = jax.random.uniform(k4, (3 * H,), minval=-bound,
                                      maxval=bound, dtype=jnp.float32)

            # Pre-transpose to (in, 3H) and zero-pad rows to a common Dpad.
            w_ih_t = jnp.zeros((self.d_pad, 3 * H), jnp.float32)
            w_ih_t = w_ih_t.at[:in_sz, :].set(w_ih.T)
            # Pre-sum r/z biases; keep b_hh_n separate (lives inside r*(...)).
            b_x = jnp.concatenate([b_ih[:2 * H] + b_hh[:2 * H], b_ih[2 * H:]])
            b_hn = b_hh[2 * H:]

            w_ih_l.append(w_ih_t)
            w_hh_l.append(w_hh.T)
            b_x_l.append(b_x.reshape(1, 3 * H))
            b_hn_l.append(b_hn.reshape(1, H))
            in_sz = H

        self.w_ih = jnp.stack(w_ih_l).astype(compute_dtype)  # (L, Dpad, 3H)
        self.w_hh = jnp.stack(w_hh_l).astype(compute_dtype)  # (L, H, 3H)
        self.b_x = jnp.stack(b_x_l)                           # (L, 1, 3H) f32
        self.b_hn = jnp.stack(b_hn_l)                         # (L, 1, H)  f32

    def _pad_input(self, x):
        if x.shape[1] < self.d_pad:
            x = jnp.pad(x, ((0, 0), (0, self.d_pad - x.shape[1])))
        return x

    def __call__(self, x, hidden):
        """x: (batch, input_size); hidden: (num_layers, batch, rnn_size)."""
        x_pad = self._pad_input(x)
        return _stacked_gru_forward_jit(x_pad, hidden, self.w_ih, self.w_hh,
                                        self.b_x, self.b_hn)

    # ---- pure-JAX reference (same bf16 operand rounding, f32 accumulation) --
    def reference(self, x, hidden):
        H = self.rnn_size
        cdt = self.w_ih.dtype
        cur = self._pad_input(x).astype(jnp.float32)
        hs = []
        for l in range(self.num_layers):
            wih = self.w_ih[l].astype(jnp.float32)
            whh = self.w_hh[l].astype(jnp.float32)
            h_prev = hidden[l].astype(jnp.float32)
            gi = cur.astype(cdt).astype(jnp.float32) @ wih + self.b_x[l]
            gh = h_prev.astype(cdt).astype(jnp.float32) @ whh
            r = jax.nn.sigmoid(gi[:, :H] + gh[:, :H])
            z = jax.nn.sigmoid(gi[:, H:2 * H] + gh[:, H:2 * H])
            n = jnp.tanh(gi[:, 2 * H:] + r * (gh[:, 2 * H:] + self.b_hn[l]))
            h_new = (1.0 - z) * n + z * h_prev
            hs.append(h_new)
            cur = cur.at[:, :H].set(h_new)
        ref_h1 = jnp.stack(hs)
        return ref_h1[-1], ref_h1


if __name__ == "__main__":
    num_layers = 3
    input_size = 128   # lane-aligned per perf review
    rnn_size = 128     # each r/z/n gate block sits on a 128-lane boundary
    batch = 8          # full sublane tile
    dropout = 0.1

    key = jax.random.PRNGKey(0)
    key, kx, kh, kp = jax.random.split(key, 4)

    x = jax.random.normal(kx, (batch, input_size), dtype=jnp.float32)
    hidden = jax.random.normal(kh, (num_layers, batch, rnn_size),
                               dtype=jnp.float32)

    model = StackedGRU(num_layers, input_size, rnn_size, dropout, kp)

    out, h_1 = model(x, hidden)
    out = jax.block_until_ready(out)
    h_1 = jax.block_until_ready(h_1)

    ref_out, ref_h1 = model.reference(x, hidden)

    assert out.shape == (batch, rnn_size)
    assert h_1.shape == (num_layers, batch, rnn_size)
    # bf16 matmul operands (f32 accumulation) on both sides -> tight tolerance,
    # loosened slightly vs. pure-f32 for accumulation-order differences.
    assert jnp.allclose(out, ref_out, atol=1e-3, rtol=1e-3)
    assert jnp.allclose(h_1, ref_h1, atol=1e-3, rtol=1e-3)

    print("KERNEL_OK")
</pallas_src>

<mosaic_0001>
module attributes {stable_mosaic.version = 11 : i64} {
  func.func @_stacked_gru_kernel(%arg0: i32, %arg1: memref<8x128xf32, #tpu.memory_space<vmem>>, %arg2: memref<1x8x128xf32, #tpu.memory_space<vmem>>, %arg3: memref<1x128x384xbf16, #tpu.memory_space<vmem>>, %arg4: memref<1x128x384xbf16, #tpu.memory_space<vmem>>, %arg5: memref<1x1x384xf32, #tpu.memory_space<vmem>>, %arg6: memref<1x1x128xf32, #tpu.memory_space<vmem>>, %arg7: memref<1x8x128xf32, #tpu.memory_space<vmem>>, %arg8: memref<8x128xf32, #tpu.memory_space<vmem>>) attributes {dimension_semantics = [#tpu.dimension_semantics<arbitrary>], iteration_bounds = array<i64: 3>, scalar_prefetch = 0 : i64, scratch_operands = 1 : i64, tpu.core_type = #tpu.core_type<tc>, window_params = [{pipeline_mode = #tpu.pipeline_mode<synchronous>, transform_indices = @transform_0, window_bounds = array<i64: 8, 128>}, {transform_indices = @transform_1, window_bounds = array<i64: 1, 8, 128>}, {transform_indices = @transform_2, window_bounds = array<i64: 1, 128, 384>}, {transform_indices = @transform_3, window_bounds = array<i64: 1, 128, 384>}, {transform_indices = @transform_4, window_bounds = array<i64: 1, 1, 384>}, {transform_indices = @transform_5, window_bounds = array<i64: 1, 1, 128>}, {transform_indices = @transform_6, window_bounds = array<i64: 1, 8, 128>}]} {
    %c0_i32 = arith.constant 0 : i32
    %0 = arith.cmpi eq, %arg0, %c0_i32 : i32
    %1 = arith.extui %0 : i1 to i32
    %c0_i32_0 = arith.constant 0 : i32
    %2 = arith.cmpi ne, %1, %c0_i32_0 : i32
    scf.if %2 {
      %c0_26 = arith.constant 0 : index
      %c0_27 = arith.constant 0 : index
      %52 = vector.load %arg1[%c0_26, %c0_27] : memref<8x128xf32, #tpu.memory_space<vmem>>, vector<8x128xf32>
      %c0_28 = arith.constant 0 : index
      %c0_29 = arith.constant 0 : index
      %53 = vector.load %arg8[%c0_28, %c0_29] : memref<8x128xf32, #tpu.memory_space<vmem>>, vector<8x128xf32>
      tpu.vector_store %arg8[%c0_28, %c0_29], %52 {strides = array<i32>} : memref<8x128xf32, #tpu.memory_space<vmem>>, vector<8x128xf32>,
    } else {
    }
    %c0 = arith.constant 0 : index
    %c0_1 = arith.constant 0 : index
    %3 = vector.load %arg8[%c0, %c0_1] : memref<8x128xf32, #tpu.memory_space<vmem>>, vector<8x128xf32>
    %c0_2 = arith.constant 0 : index
    %c0_3 = arith.constant 0 : index
    %c0_4 = arith.constant 0 : index
    %4 = vector.load %arg2[%c0_2, %c0_3, %c0_4] : memref<1x8x128xf32, #tpu.memory_space<vmem>>, vector<1x8x128xf32>
    %5 = vector.shape_cast %4 : vector<1x8x128xf32> to vector<8x128xf32>
    %6 = arith.truncf %3 : vector<8x128xf32> to vector<8x128xbf16>
    %c0_5 = arith.constant 0 : index
    %c0_6 = arith.constant 0 : index
    %c0_7 = arith.constant 0 : index
    %7 = vector.load %arg3[%c0_5, %c0_6, %c0_7] : memref<1x128x384xbf16, #tpu.memory_space<vmem>>, vector<1x128x384xbf16>
    %8 = vector.shape_cast %7 : vector<1x128x384xbf16> to vector<128x384xbf16>
    %cst = arith.constant dense<0.000000e+00> : vector<8x384xf32>
    %9 = tpu.matmul %6, %8, %cst {dimension_numbers = #tpu.dot_dimension_numbers<[1], [0], [0], [1], [0, 0, 1, 1], [], []>} : vector<8x128xbf16>, vector<128x384xbf16>, vector<8x384xf32> -> vector<8x384xf32>
    %c0_8 = arith.constant 0 : index
    %c0_9 = arith.constant 0 : index
    %c0_10 = arith.constant 0 : index
    %10 = vector.load %arg5[%c0_8, %c0_9, %c0_10] : memref<1x1x384xf32, #tpu.memory_space<vmem>>, vector<1x1x384xf32>
    %11 = vector.shape_cast %10 : vector<1x1x384xf32> to vector<1x384xf32>
    %12 = vector.broadcast %11 : vector<1x384xf32> to vector<8x384xf32>
    %13 = arith.addf %9, %12 : vector<8x384xf32>
    %14 = arith.truncf %5 : vector<8x128xf32> to vector<8x128xbf16>
    %c0_11 = arith.constant 0 : index
    %c0_12 = arith.constant 0 : index
    %c0_13 = arith.constant 0 : index
    %15 = vector.load %arg4[%c0_11, %c0_12, %c0_13] : memref<1x128x384xbf16, #tpu.memory_space<vmem>>, vector<1x128x384xbf16>
    %16 = vector.shape_cast %15 : vector<1x128x384xbf16> to vector<128x384xbf16>
    %cst_14 = arith.constant dense<0.000000e+00> : vector<8x384xf32>
    %17 = tpu.matmul %14, %16, %cst_14 {dimension_numbers = #tpu.dot_dimension_numbers<[1], [0], [0], [1], [0, 0, 1, 1], [], []>} : vector<8x128xbf16>, vector<128x384xbf16>, vector<8x384xf32> -> vector<8x384xf32>
    %18 = vector.extract_strided_slice %13 {offsets = [0, 0], sizes = [8, 128], strides = [1, 1]} : vector<8x384xf32> to vector<8x128xf32>
    %19 = vector.extract_strided_slice %13 {offsets = [0, 128], sizes = [8, 128], strides = [1, 1]} : vector<8x384xf32> to vector<8x128xf32>
    %20 = vector.extract_strided_slice %13 {offsets = [0, 256], sizes = [8, 128], strides = [1, 1]} : vector<8x384xf32> to vector<8x128xf32>
    %21 = vector.extract_strided_slice %17 {offsets = [0, 0], sizes = [8, 128], strides = [1, 1]} : vector<8x384xf32> to vector<8x128xf32>
    %22 = vector.extract_strided_slice %17 {offsets = [0, 128], sizes = [8, 128], strides = [1, 1]} : vector<8x384xf32> to vector<8x128xf32>
    %23 = vector.extract_strided_slice %17 {offsets = [0, 256], sizes = [8, 128], strides = [1, 1]} : vector<8x384xf32> to vector<8x128xf32>
    %24 = arith.addf %18, %21 : vector<8x128xf32>
    %25 = arith.negf %24 : vector<8x128xf32>
    %26 = math.exp %25 : vector<8x128xf32>
    %cst_15 = arith.constant 1.000000e+00 : f32
    %27 = vector.broadcast %cst_15 : f32 to vector<8x128xf32>
    %28 = arith.addf %27, %26 : vector<8x128xf32>
    %29 = arith.divf %27, %28 : vector<8x128xf32>
    %30 = arith.addf %19, %22 : vector<8x128xf32>
    %31 = arith.negf %30 : vector<8x128xf32>
    %32 = math.exp %31 : vector<8x128xf32>
    %cst_16 = arith.constant 1.000000e+00 : f32
    %33 = vector.broadcast %cst_16 : f32 to vector<8x128xf32>
    %34 = arith.addf %33, %32 : vector<8x128xf32>
    %35 = arith.divf %33, %34 : vector<8x128xf32>
    %c0_17 = arith.constant 0 : index
    %c0_18 = arith.constant 0 : index
    %c0_19 = arith.constant 0 : index
    %36 = vector.load %arg6[%c0_17, %c0_18, %c0_19] : memref<1x1x128xf32, #tpu.memory_space<vmem>>, vector<1x1x128xf32>
    %37 = vector.shape_cast %36 : vector<1x1x128xf32> to vector<1x128xf32>
    %38 = vector.broadcast %37 : vector<1x128xf32> to vector<8x128xf32>
    %39 = arith.addf %23, %38 : vector<8x128xf32>
    %40 = arith.mulf %29, %39 : vector<8x128xf32>
    %41 = arith.addf %20, %40 : vector<8x128xf32>
    %42 = math.tanh %41 : vector<8x128xf32>
    %cst_20 = arith.constant 1.000000e+00 : f32
    %43 = vector.broadcast %cst_20 : f32 to vector<8x128xf32>
    %44 = arith.subf %43, %35 : vector<8x128xf32>
    %45 = arith.mulf %44, %42 : vector<8x128xf32>
    %46 = arith.mulf %35, %5 : vector<8x128xf32>
    %47 = arith.addf %45, %46 : vector<8x128xf32>
    %c0_21 = arith.constant 0 : index
    %c0_22 = arith.constant 0 : index
    %c0_23 = arith.constant 0 : index
    %48 = vector.load %arg7[%c0_21, %c0_22, %c0_23] : memref<1x8x128xf32, #tpu.memory_space<vmem>>, vector<1x8x128xf32>
    %49 = vector.shape_cast %48 : vector<1x8x128xf32> to vector<8x128xf32>
    %50 = vector.shape_cast %47 : vector<8x128xf32> to vector<1x8x128xf32>
    tpu.vector_store %arg7[%c0_21, %c0_22, %c0_23], %50 {strides = array<i32>} : memref<1x8x128xf32, #tpu.memory_space<vmem>>, vector<1x8x128xf32>,
    %c0_24 = arith.constant 0 : index
    %c0_25 = arith.constant 0 : index
    %51 = vector.load %arg8[%c0_24, %c0_25] : memref<8x128xf32, #tpu.memory_space<vmem>>, vector<8x128xf32>
    tpu.vector_store %arg8[%c0_24, %c0_25], %47 {strides = array<i32>} : memref<8x128xf32, #tpu.memory_space<vmem>>, vector<8x128xf32>,
    return
  }
  func.func @transform_0(%arg0: i32) -> (i32, i32) {
    %c0_i32 = arith.constant 0 : i32
    %c0_i32_0 = arith.constant 0 : i32
    %c0_i32_1 = arith.constant 0 : i32
    return %c0_i32, %c0_i32_0 : i32, i32
  }
  func.func @transform_1(%arg0: i32) -> (i32, i32, i32) {
    %c0_i32 = arith.constant 0 : i32
    %c0_i32_0 = arith.constant 0 : i32
    %c0_i32_1 = arith.constant 0 : i32
    return %arg0, %c0_i32, %c0_i32_0 : i32, i32, i32
  }
  func.func @transform_2(%arg0: i32) -> (i32, i32, i32) {
    %c0_i32 = arith.constant 0 : i32
    %c0_i32_0 = arith.constant 0 : i32
    %c0_i32_1 = arith.constant 0 : i32
    return %arg0, %c0_i32, %c0_i32_0 : i32, i32, i32
  }
  func.func @transform_3(%arg0: i32) -> (i32, i32, i32) {
    %c0_i32 = arith.constant 0 : i32
    %c0_i32_0 = arith.constant 0 : i32
    %c0_i32_1 = arith.constant 0 : i32
    return %arg0, %c0_i32, %c0_i32_0 : i32, i32, i32
  }
  func.func @transform_4(%arg0: i32) -> (i32, i32, i32) {
    %c0_i32 = arith.constant 0 : i32
    %c0_i32_0 = arith.constant 0 : i32
    %c0_i32_1 = arith.constant 0 : i32
    return %arg0, %c0_i32, %c0_i32_0 : i32, i32, i32
  }
  func.func @transform_5(%arg0: i32) -> (i32, i32, i32) {
    %c0_i32 = arith.constant 0 : i32
    %c0_i32_0 = arith.constant 0 : i32
    %c0_i32_1 = arith.constant 0 : i32
    return %arg0, %c0_i32, %c0_i32_0 : i32, i32, i32
  }
  func.func @transform_6(%arg0: i32) -> (i32, i32, i32) {
    %c0_i32 = arith.constant 0 : i32
    %c0_i32_0 = arith.constant 0 : i32
    %c0_i32_1 = arith.constant 0 : i32
    return %arg0, %c0_i32, %c0_i32_0 : i32, i32, i32
  }
}

</mosaic_0001>

<llo_original>
// kernel: _stacked_gru_forward.1
$region0: #{_stacked_gru_forward.1}
  #allocation0 [shape = 'u32[]', space=smem, size = 0x4, offset = 0x4, fixed_abs, tag = 'smem constant byte address 0x4 - core index']
  #allocation1 [shape = 'u32[144,128]{1,0:T(1,128)}', space=vmem, size = 0x12000, scoped, tag = 'internal scratch']
  #allocation2 [shape = 'f32[8,128]{1,0:T(8,128)}', space=vmem, size = 0x1000, scoped, tag = 'scratch operand']
  %s0 = inlined_call_operand.hbm [shape: f32[8,128], index: 0, kind: input, shape index: {}]
  %s1 = inlined_call_operand.hbm [shape: f32[3,8,128], index: 1, kind: input, shape index: {}]
  %s2 = inlined_call_operand.hbm [shape: bf16[3,128,384], index: 2, kind: input, shape index: {}]
  %s3 = inlined_call_operand.hbm [shape: bf16[3,128,384], index: 3, kind: input, shape index: {}]
  %s4 = inlined_call_operand.vmem [shape: f32[3,1,384], index: 4, kind: input, shape index: {}]
  %s5 = inlined_call_operand.vmem [shape: f32[3,1,128], index: 5, kind: input, shape index: {}]
  %s6 = inlined_call_operand.vmem [shape: f32[3,8,128], index: 6, kind: output, shape index: {}]
  %s7 = sld [smem:[#allocation0]]
  $region77: #{_stacked_gru_forward.1} parent=0
    _
  %s9 = ssub.s32 1, %s7
  %s10 = scalar_select 0, %s9, %s7
  $region1: #{_stacked_gru_forward.1} parent=0
    #allocation3 [shape = 'u8[4096]{0}', space=vmem, size = 0x1000, scoped, tag = 'input window, operand 0, single buffered']
    #allocation4 [shape = 's32[2]{0}', space=sflag, size = 0x8, scoped, tag = 'scoped memory for _stacked_gru_forward.1']
    #allocation5 [shape = 'u8[8192]{0}', space=vmem, size = 0x2000, scoped, tag = 'input window, operand 1']
    #allocation6 [shape = 's32[2]{0}', space=sflag, size = 0x8, scoped, tag = 'scoped memory for _stacked_gru_forward.1']
    #allocation7 [shape = 'u8[196608]{0}', space=vmem, size = 0x30000, scoped, tag = 'input window, operand 2']
    #allocation8 [shape = 'u8[196608]{0}', space=vmem, size = 0x30000, scoped, tag = 'input window, operand 3']
    #allocation9 [shape = 's32[2]{0}', space=sflag, size = 0x8, scoped, tag = 'scoped memory for _stacked_gru_forward.1']
    %11 = vsyncpa [#allocation4], 0
    %12 = vsyncpa [#allocation6], 0
    %s13 = scalar_lea.sflag [#allocation6], 1
    %14 = vsyncpa %s13, 0
    %15 = vsyncpa [#allocation9], 0
    %s16 = scalar_lea.sflag [#allocation9], 1
    %17 = vsyncpa %s16, 0
    loop: start=0, step=1, limit=5
    $region2: #{_stacked_gru_forward.1} parent=1 // loop_pre_header
      _
    $region3: #{_stacked_gru_forward.1} parent=1 // loop_header
      %s19 = sphi 0, %s23
      %p20 = scmp.ge.s32.totalorder %s19, 5
      %s27 = sphi 0, %s27
      %s29 = sphi 0, %s27
      %s30 = sphi 0, %s29
      %s44 = sphi 0, %s30
      %s50 = sphi 0, %s52
      %s53 = sphi 0, %s50
      %s54 = sphi 0, %s53
      %s70 = sphi 0, %s54
      %s76 = sphi 0, %s78
      %s79 = sphi 0, %s76
      %s80 = sphi 0, %s79
      %s96 = sphi 0, %s80
      %s102 = sphi 0, %s104
      %s105 = sphi 0, %s102
      %s106 = sphi 0, %s105
      %s122 = sphi 0, %s106
      %s128 = sphi 0, %s130
      %s131 = sphi 0, %s128
      %s132 = sphi 0, %s131
      %s148 = sphi 0, %s132
      %s154 = sphi 0, %s156
      %s157 = sphi 0, %s154
      %s158 = sphi 0, %s157
      %s174 = sphi 0, %s158
      %s180 = sphi 0, %s182
      %s183 = sphi 0, %s180
      %s184 = sphi 0, %s183
      %s200 = sphi 0, %s184
    $region4: #{_stacked_gru_forward.1} parent=1 // loop_header_branch
      %22 = sbr.rel (%p20) target = $region8
    $region5: #{_stacked_gru_forward.1} parent=1 // loop_body
      %s24 = ssub.s32 %s19, 1
      %s25 = ssub.s32 %s19, 2
      %s26 = sadd.s32 %s19, 1
      %s28 = sadd.s32 %s27, 1
      %p31 = scmp.eq.s32.totalorder %s19, 2
      %p32 = scmp.ne.s32.totalorder %s27, %s29
      %p33 = scmp.eq.s32.totalorder %s19, 0
      %p34 = por %p32, %p33
      %p35 = scmp.ne.s32.totalorder %s27, %s29
      %p36 = scmp.eq.s32.totalorder %s24, 2
      %p37 = por %p35, %p36
      %p38 = scmp.ne.s32.totalorder %s29, %s30
      %p39 = scmp.eq.s32.totalorder %s24, 0
      %p40 = por %p38, %p39
      %p41 = scmp.ne.s32.totalorder %s29, %s30
      %p42 = scmp.eq.s32.totalorder %s25, 2
      %p43 = por %p41, %p42
      %p45 = scmp.ne.s32.totalorder %s30, %s44
      %p46 = scmp.eq.s32.totalorder %s25, 0
      %p47 = por %p45, %p46
      %s48 = ssub.s32 %s19, %s26
      %p49 = scmp.eq.s32.totalorder %s48, 0
      %s51 = sadd.s32 %s50, 1
      %s52 = scalar_select %p49, %s50, %s51
      %p55 = pneg %p49
      %p56 = scmp.eq.s32.totalorder %s19, 2
      %p57 = por %p55, %p56
      %p58 = scmp.ne.s32.totalorder %s50, %s53
      %p59 = scmp.eq.s32.totalorder %s19, 0
      %p60 = por %p58, %p59
      %p61 = scmp.ne.s32.totalorder %s50, %s53
      %p62 = scmp.eq.s32.totalorder %s24, 2
      %p63 = por %p61, %p62
      %p64 = scmp.ne.s32.totalorder %s53, %s54
      %p65 = scmp.eq.s32.totalorder %s24, 0
      %p66 = por %p64, %p65
      %p67 = scmp.ne.s32.totalorder %s53, %s54
      %p68 = scmp.eq.s32.totalorder %s25, 2
      %p69 = por %p67, %p68
      %p71 = scmp.ne.s32.totalorder %s54, %s70
      %p72 = scmp.eq.s32.totalorder %s25, 0
      %p73 = por %p71, %p72
      %s74 = ssub.s32 %s19, %s26
      %p75 = scmp.eq.s32.totalorder %s74, 0
      %s77 = sadd.s32 %s76, 1
      %s78 = scalar_select %p75, %s76, %s77
      %p81 = pneg %p75
      %p82 = scmp.eq.s32.totalorder %s19, 2
      %p83 = por %p81, %p82
      %p84 = scmp.ne.s32.totalorder %s76, %s79
      %p85 = scmp.eq.s32.totalorder %s19, 0
      %p86 = por %p84, %p85
      %p87 = scmp.ne.s32.totalorder %s76, %s79
      %p88 = scmp.eq.s32.totalorder %s24, 2
      %p89 = por %p87, %p88
      %p90 = scmp.ne.s32.totalorder %s79, %s80
      %p91 = scmp.eq.s32.totalorder %s24, 0
      %p92 = por %p90, %p91
      %p93 = scmp.ne.s32.totalorder %s79, %s80
      %p94 = scmp.eq.s32.totalorder %s25, 2
      %p95 = por %p93, %p94
      %p97 = scmp.ne.s32.totalorder %s80, %s96
      %p98 = scmp.eq.s32.totalorder %s25, 0
      %p99 = por %p97, %p98
      %s100 = ssub.s32 %s19, %s26
      %p101 = scmp.eq.s32.totalorder %s100, 0
      %s103 = sadd.s32 %s102, 1
      %s104 = scalar_select %p101, %s102, %s103
      %p107 = pneg %p101
      %p108 = scmp.eq.s32.totalorder %s19, 2
      %p109 = por %p107, %p108
      %p110 = scmp.ne.s32.totalorder %s102, %s105
      %p111 = scmp.eq.s32.totalorder %s19, 0
      %p112 = por %p110, %p111
      %p113 = scmp.ne.s32.totalorder %s102, %s105
      %p114 = scmp.eq.s32.totalorder %s24, 2
      %p115 = por %p113, %p114
      %p116 = scmp.ne.s32.totalorder %s105, %s106
      %p117 = scmp.eq.s32.totalorder %s24, 0
      %p118 = por %p116, %p117
      %p119 = scmp.ne.s32.totalorder %s105, %s106
      %p120 = scmp.eq.s32.totalorder %s25, 2
      %p121 = por %p119, %p120
      %p123 = scmp.ne.s32.totalorder %s106, %s122
      %p124 = scmp.eq.s32.totalorder %s25, 0
      %p125 = por %p123, %p124
      %s126 = ssub.s32 %s19, %s26
      %p127 = scmp.eq.s32.totalorder %s126, 0
      %s129 = sadd.s32 %s128, 1
      %s130 = scalar_select %p127, %s128, %s129
      %p133 = pneg %p127
      %p134 = scmp.eq.s32.totalorder %s19, 2
      %p135 = por %p133, %p134
      %p136 = scmp.ne.s32.totalorder %s128, %s131
      %p137 = scmp.eq.s32.totalorder %s19, 0
      %p138 = por %p136, %p137
      %p139 = scmp.ne.s32.totalorder %s128, %s131
      %p140 = scmp.eq.s32.totalorder %s24, 2
      %p141 = por %p139, %p140
      %p142 = scmp.ne.s32.totalorder %s131, %s132
      %p143 = scmp.eq.s32.totalorder %s24, 0
      %p144 = por %p142, %p143
      %p145 = scmp.ne.s32.totalorder %s131, %s132
      %p146 = scmp.eq.s32.totalorder %s25, 2
      %p147 = por %p145, %p146
      %p149 = scmp.ne.s32.totalorder %s132, %s148
      %p150 = scmp.eq.s32.totalorder %s25, 0
      %p151 = por %p149, %p150
      %s152 = ssub.s32 %s19, %s26
      %p153 = scmp.eq.s32.totalorder %s152, 0
      %s155 = sadd.s32 %s154, 1
      %s156 = scalar_select %p153, %s154, %s155
      %p159 = pneg %p153
      %p160 = scmp.eq.s32.totalorder %s19, 2
      %p161 = por %p159, %p160
      %p162 = scmp.ne.s32.totalorder %s154, %s157
      %p163 = scmp.eq.s32.totalorder %s19, 0
      %p164 = por %p162, %p163
      %p165 = scmp.ne.s32.totalorder %s154, %s157
      %p166 = scmp.eq.s32.totalorder %s24, 2
      %p167 = por %p165, %p166
      %p168 = scmp.ne.s32.totalorder %s157, %s158
      %p169 = scmp.eq.s32.totalorder %s24, 0
      %p170 = por %p168, %p169
      %p171 = scmp.ne.s32.totalorder %s157, %s158
      %p172 = scmp.eq.s32.totalorder %s25, 2
      %p173 = por %p171, %p172
      %p175 = scmp.ne.s32.totalorder %s158, %s174
      %p176 = scmp.eq.s32.totalorder %s25, 0
      %p177 = por %p175, %p176
      %s178 = ssub.s32 %s19, %s26
      %p179 = scmp.eq.s32.totalorder %s178, 0
      %s181 = sadd.s32 %s180, 1
      %s182 = scalar_select %p179, %s180, %s181
      %p185 = pneg %p179
      %p186 = scmp.eq.s32.totalorder %s19, 2
      %p187 = por %p185, %p186
      %p188 = scmp.ne.s32.totalorder %s180, %s183
      %p189 = scmp.eq.s32.totalorder %s19, 0
      %p190 = por %p188, %p189
      %p191 = scmp.ne.s32.totalorder %s180, %s183
      %p192 = scmp.eq.s32.totalorder %s24, 2
      %p193 = por %p191, %p192
      %p194 = scmp.ne.s32.totalorder %s183, %s184
      %p195 = scmp.eq.s32.totalorder %s24, 0
      %p196 = por %p194, %p195
      %p197 = scmp.ne.s32.totalorder %s183, %s184
      %p198 = scmp.eq.s32.totalorder %s25, 2
      %p199 = por %p197, %p198
      %p201 = scmp.ne.s32.totalorder %s184, %s200
      %p202 = scmp.eq.s32.totalorder %s25, 0
      %p203 = por %p201, %p202
      %p204 = scmp.le.s32.totalorder 1, %s19
      %p205 = scmp.lt.s32.totalorder %s19, 4
      %p206 = pnand %p204, %p205
      %p207 = pneg %p206
      // Predicated region
      $region9: #{_stacked_gru_forward.1} parent=5 // pred_check
        _
      $region10: #{_stacked_gru_forward.1} parent=5 // pred_check_branch
        %209 = sbr.rel (%p206) target = $region12
      $region11: #{_stacked_gru_forward.1} parent=5 // pred_region
        %s210 = ssub.s32 %s19, 1
        // Predicated region
        $region13: #{_stacked_gru_forward.1} parent=11 // pred_check
          %p211 = pneg %p40
        $region14: #{_stacked_gru_forward.1} parent=11 // pred_check_branch
          %213 = sbr.rel (%p211) target = $region16
        $region15: #{_stacked_gru_forward.1} parent=11 // pred_region
          %s215 = ssub.s32 128, 128
          %216 = vsyncadd [#allocation4], %s215
          %s218 = sshll.u32 [#allocation3], 4
          %s219 = int_to_ptr.vmem [resolvable:$true] %s218
          %221 = dma.hbm_to_vmem [thread:$0]  %s0, 128, %s219, [#allocation4]
        $region16: #{_stacked_gru_forward.1} parent=11 // pred_fallthru
          _
      $region12: #{_stacked_gru_forward.1} parent=5 // pred_fallthru
        _
      %p222 = scmp.lt.s32.totalorder %s19, 3
      // Predicated region
      $region17: #{_stacked_gru_forward.1} parent=5 // pred_check
        %p223 = pneg %p222
      $region18: #{_stacked_gru_forward.1} parent=5 // pred_check_branch
        %225 = sbr.rel (%p223) target = $region20
      $region19: #{_stacked_gru_forward.1} parent=5 // pred_region
        // Predicated region
        $region21: #{_stacked_gru_forward.1} parent=19 // pred_check
          %p226 = pneg %p60
        $region22: #{_stacked_gru_forward.1} parent=19 // pred_check_branch
          %228 = sbr.rel (%p226) target = $region24
        $region23: #{_stacked_gru_forward.1} parent=19 // pred_region
          %s229 = sand.u32 %s19, 1
          %s230 = scalar_lea.sflag [#allocation6], %s229
          %s231 = sand.u32 %s50, 1
          %s232 = smul.addr %s231, 8
          %s233 = scalar_lea.vmem [#allocation5], %s232
          %s235 = ssub.s32 128, 128
          %236 = vsyncadd %s230, %s235
          %s237 = smul.addr %s19, 128
          %s238 = scalar_lea.hbm %s1, %s237
          %s240 = sshll.u32 %s233, 4
          %s241 = int_to_ptr.vmem [resolvable:$true] %s240
          %243 = dma.hbm_to_vmem [thread:$0]  %s238, 128, %s241, %s230
        $region24: #{_stacked_gru_forward.1} parent=19 // pred_fallthru
          _
        // Predicated region
        $region25: #{_stacked_gru_forward.1} parent=19 // pred_check
          %p244 = pneg %p86
        $region26: #{_stacked_gru_forward.1} parent=19 // pred_check_branch
          %246 = sbr.rel (%p244) target = $region28
        $region27: #{_stacked_gru_forward.1} parent=19 // pred_region
          %s247 = sand.u32 %s19, 1
          %s248 = scalar_lea.sflag [#allocation6], %s247
          %s249 = sand.u32 %s76, 1
          %s250 = smul.addr %s249, 192
          %s251 = scalar_lea.vmem [#allocation7], %s250
          %s253 = ssub.s32 3072, 3072
          %254 = vsyncadd %s248, %s253
          %s255 = smul.addr %s19, 48
          %s256 = smul.addr %s255, 64
          %s257 = scalar_lea.hbm %s2, %s256
          %s258 = sshll.u32 %s251, 4
          %s259 = int_to_ptr.vmem [resolvable:$true] %s258
          %264 = dma.hbm_to_vmem [thread:$0]  %s257, 3072, %s259, %s248, 192, 192, 12
        $region28: #{_stacked_gru_forward.1} parent=19 // pred_fallthru
          _
        // Predicated region
        $region29: #{_stacked_gru_forward.1} parent=19 // pred_check
          %p265 = pneg %p112
        $region30: #{_stacked_gru_forward.1} parent=19 // pred_check_branch
          %267 = sbr.rel (%p265) target = $region32
        $region31: #{_stacked_gru_forward.1} parent=19 // pred_region
          %s268 = sand.u32 %s102, 1
          %s269 = scalar_lea.sflag [#allocation9], %s268
          %s270 = sand.u32 %s102, 1
          %s271 = smul.addr %s270, 192
          %s272 = scalar_lea.vmem [#allocation8], %s271
          %s274 = ssub.s32 3072, 3072
          %275 = vsyncadd %s269, %s274
          %s276 = smul.addr %s19, 48
          %s277 = smul.addr %s276, 64
          %s278 = scalar_lea.hbm %s3, %s277
          %s279 = sshll.u32 %s272, 4
          %s280 = int_to_ptr.vmem [resolvable:$true] %s279
          %285 = dma.hbm_to_vmem [thread:$0]  %s278, 3072, %s280, %s269, 192, 192, 12
        $region32: #{_stacked_gru_forward.1} parent=19 // pred_fallthru
          _
        // Predicated region
        $region33: #{_stacked_gru_forward.1} parent=19 // pred_check
          %p286 = pneg %p138
        $region34: #{_stacked_gru_forward.1} parent=19 // pred_check_branch
          %288 = sbr.rel (%p286) target = $region36
        $region35: #{_stacked_gru_forward.1} parent=19 // pred_region
          %p289 = scmp.lt.s32.totalorder %s19, 2
          %s290 = scalar_select %p289, %s19, 2
          %s291 = smul.addr %s290, 3
          %s292 = scalar_lea.vmem %s4, %s291
        $region36: #{_stacked_gru_forward.1} parent=19 // pred_fallthru
          _
        // Predicated region
        $region37: #{_stacked_gru_forward.1} parent=19 // pred_check
          %p293 = pneg %p164
        $region38: #{_stacked_gru_forward.1} parent=19 // pred_check_branch
          %295 = sbr.rel (%p293) target = $region40
        $region39: #{_stacked_gru_forward.1} parent=19 // pred_region
          %p296 = scmp.lt.s32.totalorder %s19, 2
          %s297 = scalar_select %p296, %s19, 2
          %s298 = scalar_lea.vmem %s5, %s297
        $region40: #{_stacked_gru_forward.1} parent=19 // pred_fallthru
          _
      $region20: #{_stacked_gru_forward.1} parent=5 // pred_fallthru
        _
      %p299 = scmp.le.s32.totalorder 1, %s19
      %p300 = scmp.lt.s32.totalorder %s19, 4
      %p301 = pnand %p299, %p300
      %p302 = pneg %p301
      // Predicated region
      $region41: #{_stacked_gru_forward.1} parent=5 // pred_check
        _
      $region42: #{_stacked_gru_forward.1} parent=5 // pred_check_branch
        %304 = sbr.rel (%p301) target = $region44
      $region43: #{_stacked_gru_forward.1} parent=5 // pred_region
        %s305 = ssub.s32 %s19, 1
        // Predicated region
        $region45: #{_stacked_gru_forward.1} parent=43 // pred_check
          %p306 = pneg %p40
        $region46: #{_stacked_gru_forward.1} parent=43 // pred_check_branch
          %308 = sbr.rel (%p306) target = $region48
        $region47: #{_stacked_gru_forward.1} parent=43 // pred_region
          %309 = dma.done [#allocation4], 128
        $region48: #{_stacked_gru_forward.1} parent=43 // pred_fallthru
          _
        %s310 = sand.u32 %s24, 1
        %s311 = scalar_lea.sflag [#allocation6], %s310
        %s312 = sand.u32 %s53, 1
        %s313 = smul.addr %s312, 8
        %s314 = scalar_lea.vmem [#allocation5], %s313
        // Predicated region
        $region49: #{_stacked_gru_forward.1} parent=43 // pred_check
          %p315 = pneg %p66
        $region50: #{_stacked_gru_forward.1} parent=43 // pred_check_branch
          %317 = sbr.rel (%p315) target = $region52
        $region51: #{_stacked_gru_forward.1} parent=43 // pred_region
          %318 = dma.done %s311, 128
        $region52: #{_stacked_gru_forward.1} parent=43 // pred_fallthru
          _
        %s319 = sand.u32 %s24, 1
        %s320 = scalar_lea.sflag [#allocation6], %s319
        %s321 = sand.u32 %s79, 1
        %s322 = smul.addr %s321, 192
        %s323 = scalar_lea.vmem [#allocation7], %s322
        // Predicated region
        $region53: #{_stacked_gru_forward.1} parent=43 // pred_check
          %p324 = pneg %p92
        $region54: #{_stacked_gru_forward.1} parent=43 // pred_check_branch
          %326 = sbr.rel (%p324) target = $region56
        $region55: #{_stacked_gru_forward.1} parent=43 // pred_region
          %327 = dma.done %s320, 3072
        $region56: #{_stacked_gru_forward.1} parent=43 // pred_fallthru
          _
        %s328 = sand.u32 %s105, 1
        %s329 = scalar_lea.sflag [#allocation9], %s328
        %s330 = sand.u32 %s105, 1
        %s331 = smul.addr %s330, 192
        %s332 = scalar_lea.vmem [#allocation8], %s331
        // Predicated region
        $region57: #{_stacked_gru_forward.1} parent=43 // pred_check
          %p333 = pneg %p118
        $region58: #{_stacked_gru_forward.1} parent=43 // pred_check_branch
          %335 = sbr.rel (%p333) target = $region60
        $region59: #{_stacked_gru_forward.1} parent=43 // pred_region
          %336 = dma.done %s329, 3072
        $region60: #{_stacked_gru_forward.1} parent=43 // pred_fallthru
          _
        %p337 = pneg %p40
        %p338 = pneg %p37
        %s339 = sand.u32 %s24, 1
        %s340 = scalar_lea.sflag [#allocation6], %s339
        %s341 = sand.u32 %s53, 1
        %s342 = smul.addr %s341, 8
        %s343 = scalar_lea.vmem [#allocation5], %s342
        %p344 = pneg %p66
        %p345 = pneg %p63
        %s346 = sand.u32 %s24, 1
        %s347 = scalar_lea.sflag [#allocation6], %s346
        %s348 = sand.u32 %s79, 1
        %s349 = smul.addr %s348, 192
        %s350 = scalar_lea.vmem [#allocation7], %s349
        %p351 = pneg %p92
        %p352 = pneg %p89
        %s353 = sand.u32 %s105, 1
        %s354 = scalar_lea.sflag [#allocation9], %s353
        %s355 = sand.u32 %s105, 1
        %s356 = smul.addr %s355, 192
        %s357 = scalar_lea.vmem [#allocation8], %s356
        %p358 = pneg %p118
        %p359 = pneg %p115
        %p360 = scmp.lt.s32.totalorder %s24, 2
        %s361 = scalar_select %p360, %s24, 2
        %s362 = smul.addr %s361, 3
        %s363 = scalar_lea.vmem %s4, %s362
        %p364 = pneg %p144
        %p365 = pneg %p141
        %p366 = scmp.lt.s32.totalorder %s24, 2
        %s367 = scalar_select %p366, %s24, 2
        %s368 = scalar_lea.vmem %s5, %s367
        %p369 = pneg %p170
        %p370 = pneg %p167
        %p371 = pneg %p196
        %p372 = pneg %p193
        %p373 = scmp.lt.s32.totalorder %s24, 2
        %s374 = scalar_select %p373, %s24, 2
        %s375 = smul.addr %s374, 8
        %s376 = scalar_lea.vmem %s6, %s375
        %p377 = scmp.lt.s32.totalorder %s24, 2
        %s378 = scalar_select %p377, %s24, 2
        %s379 = smul.addr %s378, 3
        %s380 = scalar_lea.vmem %s4, %s379
        %p381 = scmp.lt.s32.totalorder %s24, 2
        %s382 = scalar_select %p381, %s24, 2
        %s383 = scalar_lea.vmem %s5, %s382
        %p384 = scmp.lt.s32.totalorder %s24, 2
        %s385 = scalar_select %p384, %s24, 2
        %s386 = smul.addr %s385, 8
        %s387 = scalar_lea.vmem %s6, %s386
        %p389 = scmp.eq.s32.totalorder %s24, 0
        // Predicated region
        $region61: #{_stacked_gru_forward.1} parent=43 // pred_check
          %p390 = pneg %p389
        $region62: #{_stacked_gru_forward.1} parent=43 // pred_check_branch
          %392 = sbr.rel (%p390) target = $region64
        $region63: #{_stacked_gru_forward.1} parent=43 // pred_region
          %v393 = vld [vmem:[#allocation3] sm:$0xff]
          %394 = vst [vmem:[#allocation2] sm:$0xff] %v393
        $region64: #{_stacked_gru_forward.1} parent=43 // pred_fallthru
          _
        %v395 = vld [vmem:[#allocation2] sm:$0xff]
        %v396 = vld [vmem:[%s314] sm:$0xff]
        %v397 = vpack.c.bf16 %v395, %v395
        %v398 = vld [vmem:[%s323] sm:$0xff]
        %v399 = vld [vmem:[%s323 + $0x8] sm:$0xf]
        %v400 = vld [vmem:[%s323 + $0xc] sm:$0xff]
        %v401 = vld [vmem:[%s323 + $0x14] sm:$0xf]
        %v402 = vld [vmem:[%s323 + $0x18] sm:$0xff]
        %v403 = vld [vmem:[%s323 + $0x20] sm:$0xf]
        %v404 = vld [vmem:[%s323 + $0x24] sm:$0xff]
        %v405 = vld [vmem:[%s323 + $0x2c] sm:$0xf]
        %v406 = vld [vmem:[%s323 + $0x30] sm:$0xff]
        %v407 = vld [vmem:[%s323 + $0x38] sm:$0xf]
        %v408 = vld [vmem:[%s323 + $0x3c] sm:$0xff]
        %v409 = vld [vmem:[%s323 + $0x44] sm:$0xf]
        %v410 = vld [vmem:[%s323 + $0x48] sm:$0xff]
        %v411 = vld [vmem:[%s323 + $0x50] sm:$0xf]
        %v412 = vld [vmem:[%s323 + $0x54] sm:$0xff]
        %v413 = vld [vmem:[%s323 + $0x5c] sm:$0xf]
        %v414 = vld [vmem:[%s323 + $0x60] sm:$0xff]
        %v415 = vld [vmem:[%s323 + $0x68] sm:$0xf]
        %v416 = vld [vmem:[%s323 + $0x6c] sm:$0xff]
        %v417 = vld [vmem:[%s323 + $0x74] sm:$0xf]
        %v418 = vld [vmem:[%s323 + $0x78] sm:$0xff]
        %v419 = vld [vmem:[%s323 + $0x80] sm:$0xf]
        %v420 = vld [vmem:[%s323 + $0x84] sm:$0xff]
        %v421 = vld [vmem:[%s323 + $0x8c] sm:$0xf]
        %v422 = vld [vmem:[%s323 + $0x90] sm:$0xff]
        %v423 = vld [vmem:[%s323 + $0x98] sm:$0xf]
        %v424 = vld [vmem:[%s323 + $0x9c] sm:$0xff]
        %v425 = vld [vmem:[%s323 + $0xa4] sm:$0xf]
        %v426 = vld [vmem:[%s323 + $0xa8] sm:$0xff]
        %v427 = vld [vmem:[%s323 + $0xb0] sm:$0xf]
        %v428 = vld [vmem:[%s323 + $0xb4] sm:$0xff]
        %v429 = vld [vmem:[%s323 + $0xbc] sm:$0xf]
        %v430 = vld [vmem:[%s380] sm:$0x7]
        %v432 = vlaneseq
        %v433 = vshrl.u32 %v432, 7
        %v434 = vsub.s32 0, %v433
        %v435 = vrot.slane %v430, %v434
        %v436 = vlaneseq
        %v437 = vshrl.u32 %v436, 7
        %v438 = vsub.s32 1, %v437
        %v439 = vrot.slane %v430, %v438
        %v440 = vlaneseq
        %v441 = vshrl.u32 %v440, 7
        %v442 = vsub.s32 2, %v441
        %v443 = vrot.slane %v430, %v442
        %v479 = vunpack.c.l.b16 %v398
        %v480 = vunpack.c.h.b16 %v398
        %v481 = vunpack.c.l.b16 %v399
        %v482 = vunpack.c.l.b16 %v400
        %v483 = vunpack.c.h.b16 %v400
        %v484 = vunpack.c.l.b16 %v401
        %v485 = vunpack.c.l.b16 %v402
        %v486 = vunpack.c.h.b16 %v402
        %v487 = vunpack.c.l.b16 %v403
        %v488 = vunpack.c.l.b16 %v404
        %v489 = vunpack.c.h.b16 %v404
        %v490 = vunpack.c.l.b16 %v405
        %v491 = vunpack.c.l.b16 %v406
        %v492 = vunpack.c.h.b16 %v406
        %v493 = vunpack.c.l.b16 %v407
        %v494 = vunpack.c.l.b16 %v408
        %v495 = vunpack.c.h.b16 %v408
        %v496 = vunpack.c.l.b16 %v409
        %v497 = vunpack.c.l.b16 %v410
        %v498 = vunpack.c.h.b16 %v410
        %v499 = vunpack.c.l.b16 %v411
        %v500 = vunpack.c.l.b16 %v412
        %v501 = vunpack.c.h.b16 %v412
        %v502 = vunpack.c.l.b16 %v413
        %v503 = vunpack.c.l.b16 %v414
        %v504 = vunpack.c.h.b16 %v414
        %v505 = vunpack.c.l.b16 %v415
        %v506 = vunpack.c.l.b16 %v416
        %v507 = vunpack.c.h.b16 %v416
        %v508 = vunpack.c.l.b16 %v417
        %v509 = vunpack.c.l.b16 %v418
        %v510 = vunpack.c.h.b16 %v418
        %v511 = vunpack.c.l.b16 %v419
        %v512 = vunpack.c.l.b16 %v420
        %v513 = vunpack.c.h.b16 %v420
        %v514 = vunpack.c.l.b16 %v421
        %v515 = vunpack.c.l.b16 %v422
        %v516 = vunpack.c.h.b16 %v422
        %v517 = vunpack.c.l.b16 %v423
        %v518 = vunpack.c.l.b16 %v424
        %v519 = vunpack.c.h.b16 %v424
        %v520 = vunpack.c.l.b16 %v425
        %v521 = vunpack.c.l.b16 %v426
        %v522 = vunpack.c.h.b16 %v426
        %v523 = vunpack.c.l.b16 %v427
        %v524 = vunpack.c.l.b16 %v428
        %v525 = vunpack.c.h.b16 %v428
        %v526 = vunpack.c.l.b16 %v429
        %v527 = vpack.c.b16 %v482, %v479
        %v528 = vpack.c.b16 %v483, %v480
        %v529 = vpack.c.b16 %v484, %v481
        %v530 = vpack.c.b16 %v488, %v485
        %v531 = vpack.c.b16 %v489, %v486
        %v532 = vpack.c.b16 %v490, %v487
        %v533 = vpack.c.b16 %v494, %v491
        %v534 = vpack.c.b16 %v495, %v492
        %v535 = vpack.c.b16 %v496, %v493
        %v536 = vpack.c.b16 %v500, %v497
        %v537 = vpack.c.b16 %v501, %v498
        %v538 = vpack.c.b16 %v502, %v499
        %v539 = vpack.c.b16 %v506, %v503
        %v540 = vpack.c.b16 %v507, %v504
        %v541 = vpack.c.b16 %v508, %v505
        %v542 = vpack.c.b16 %v512, %v509
        %v543 = vpack.c.b16 %v513, %v510
        %v544 = vpack.c.b16 %v514, %v511
        %v545 = vpack.c.b16 %v518, %v515
        %v546 = vpack.c.b16 %v519, %v516
        %v547 = vpack.c.b16 %v520, %v517
        %v548 = vpack.c.b16 %v524, %v521
        %v549 = vpack.c.b16 %v525, %v522
        %v550 = vpack.c.b16 %v526, %v523
        %575 = vmatprep.subr.bf16.mxu0 %v528
        %576 = vmatpush1.bf16.msra.mxu0 %v527
        %577 = vmatprep.subr.bf16.mxu0 %v531
        %578 = vmatpush1.bf16.msra.mxu0 %v530
        %579 = vmatprep.subr.bf16.mxu0 %v534
        %580 = vmatpush1.bf16.msra.mxu0 %v533
        %581 = vmatprep.subr.bf16.mxu0 %v537
        %582 = vmatpush1.bf16.msra.mxu0 %v536
        %583 = vmatprep.subr.bf16.mxu0 %v540
        %584 = vmatpush1.bf16.msra.mxu0 %v539
        %585 = vmatprep.subr.bf16.mxu0 %v543
        %586 = vmatpush1.bf16.msra.mxu0 %v542
        %587 = vmatprep.subr.bf16.mxu0 %v546
        %588 = vmatpush1.bf16.msra.mxu0 %v545
        %589 = vmatprep.subr.bf16.mxu0 %v549
        %590 = vmatpush1.bf16.msra.mxu0 %v548
        %591 = vmatprep.subr.bf16.mxu0 0
        %592 = vmatpush1.bf16.msra.mxu0 0
        %593 = vmatprep.subr.bf16.mxu0 0
        %594 = vmatpush1.bf16.msra.mxu0 0
        %595 = vmatprep.subr.bf16.mxu0 0
        %596 = vmatpush1.bf16.msra.mxu0 0
        %597 = vmatprep.subr.bf16.mxu0 0
        %598 = vmatpush1.bf16.msra.mxu0 0
        %599 = vmatprep.subr.bf16.mxu0 0
        %600 = vmatpush1.bf16.msra.mxu0 0
        %601 = vmatprep.subr.bf16.mxu0 0
        %602 = vmatpush1.bf16.msra.mxu0 0
        %603 = vmatprep.subr.bf16.mxu0 0
        %604 = vmatpush1.bf16.msra.mxu0 0
        %605 = vmatprep.subr.bf16.mxu0 0
        %606 = vmatpush1.bf16.msra.mxu0 0
        %607 = vmatprep.mubr.bf16.mxu0 0
        %608 = vmatmul.mubr.bf16.gmra.mrb[0].mxu0 %v397
        %v609 = vpop.f32.mrb[0].mxu0
        %v610 = vadd.f32 %v435, %v609
        %v611 = vpop.f32.mrb[0].mxu0
        %v612 = vadd.f32 %v439, %v611
        %v613 = vpop.f32.mrb[0].mxu0
        %v614 = vpop.f32.mrb[0].mxu0
        %615 = vdwg.mxu0
        %616 = vmatprep.subr.bf16.mxu0 0
        %617 = vmatpush1.bf16.msra.mxu0 %v529
        %618 = vmatprep.subr.bf16.mxu0 0
        %619 = vmatpush1.bf16.msra.mxu0 %v532
        %620 = vmatprep.subr.bf16.mxu0 0
        %621 = vmatpush1.bf16.msra.mxu0 %v535
        %622 = vmatprep.subr.bf16.mxu0 0
        %623 = vmatpush1.bf16.msra.mxu0 %v538
        %624 = vmatprep.subr.bf16.mxu0 0
        %625 = vmatpush1.bf16.msra.mxu0 %v541
        %626 = vmatprep.subr.bf16.mxu0 0
        %627 = vmatpush1.bf16.msra.mxu0 %v544
        %628 = vmatprep.subr.bf16.mxu0 0
        %629 = vmatpush1.bf16.msra.mxu0 %v547
        %630 = vmatprep.subr.bf16.mxu0 0
        %631 = vmatpush1.bf16.msra.mxu0 %v550
        %632 = vmatprep.subr.bf16.mxu0 0
        %633 = vmatpush1.bf16.msra.mxu0 0
        %634 = vmatprep.subr.bf16.mxu0 0
        %635 = vmatpush1.bf16.msra.mxu0 0
        %636 = vmatprep.subr.bf16.mxu0 0
        %637 = vmatpush1.bf16.msra.mxu0 0
        %638 = vmatprep.subr.bf16.mxu0 0
        %639 = vmatpush1.bf16.msra.mxu0 0
        %640 = vmatprep.subr.bf16.mxu0 0
        %641 = vmatpush1.bf16.msra.mxu0 0
        %642 = vmatprep.subr.bf16.mxu0 0
        %643 = vmatpush1.bf16.msra.mxu0 0
        %644 = vmatprep.subr.bf16.mxu0 0
        %645 = vmatpush1.bf16.msra.mxu0 0
        %646 = vmatprep.subr.bf16.mxu0 0
        %647 = vmatpush1.bf16.msra.mxu0 0
        %648 = vmatprep.mubr.bf16.mxu0 0
        %649 = vmatmul.mubr.bf16.gmra.mrb[0].mxu0 %v397
        %v650 = vpop.f32.mrb[0].mxu0
        %v651 = vadd.f32 %v443, %v650
        %v652 = vpop.f32.mrb[0].mxu0
        %v653 = vpop.f32.mrb[0].mxu0
        %v654 = vpop.f32.mrb[0].mxu0
        %655 = vdwg.mxu0
        %v656 = vpack.c.bf16 %v396, %v396
        %v657 = vld [vmem:[%s332] sm:$0xff]
        %v658 = vld [vmem:[%s332 + $0x8] sm:$0xf]
        %v659 = vld [vmem:[%s332 + $0xc] sm:$0xff]
        %v660 = vld [vmem:[%s332 + $0x14] sm:$0xf]
        %v661 = vld [vmem:[%s332 + $0x18] sm:$0xff]
        %v662 = vld [vmem:[%s332 + $0x20] sm:$0xf]
        %v663 = vld [vmem:[%s332 + $0x24] sm:$0xff]
        %v664 = vld [vmem:[%s332 + $0x2c] sm:$0xf]
        %v665 = vld [vmem:[%s332 + $0x30] sm:$0xff]
        %v666 = vld [vmem:[%s332 + $0x38] sm:$0xf]
        %v667 = vld [vmem:[%s332 + $0x3c] sm:$0xff]
        %v668 = vld [vmem:[%s332 + $0x44] sm:$0xf]
        %v669 = vld [vmem:[%s332 + $0x48] sm:$0xff]
        %v670 = vld [vmem:[%s332 + $0x50] sm:$0xf]
        %v671 = vld [vmem:[%s332 + $0x54] sm:$0xff]
        %v672 = vld [vmem:[%s332 + $0x5c] sm:$0xf]
        %v673 = vld [vmem:[%s332 + $0x60] sm:$0xff]
        %v674 = vld [vmem:[%s332 + $0x68] sm:$0xf]
        %v675 = vld [vmem:[%s332 + $0x6c] sm:$0xff]
        %v676 = vld [vmem:[%s332 + $0x74] sm:$0xf]
        %v677 = vld [vmem:[%s332 + $0x78] sm:$0xff]
        %v678 = vld [vmem:[%s332 + $0x80] sm:$0xf]
        %v679 = vld [vmem:[%s332 + $0x84] sm:$0xff]
        %v680 = vld [vmem:[%s332 + $0x8c] sm:$0xf]
        %v681 = vld [vmem:[%s332 + $0x90] sm:$0xff]
        %v682 = vld [vmem:[%s332 + $0x98] sm:$0xf]
        %v683 = vld [vmem:[%s332 + $0x9c] sm:$0xff]
        %v684 = vld [vmem:[%s332 + $0xa4] sm:$0xf]
        %v685 = vld [vmem:[%s332 + $0xa8] sm:$0xff]
        %v686 = vld [vmem:[%s332 + $0xb0] sm:$0xf]
        %v687 = vld [vmem:[%s332 + $0xb4] sm:$0xff]
        %v688 = vld [vmem:[%s332 + $0xbc] sm:$0xf]
        %v721 = vunpack.c.l.b16 %v657
        %v722 = vunpack.c.h.b16 %v657
        %v723 = vunpack.c.l.b16 %v658
        %v724 = vunpack.c.l.b16 %v659
        %v725 = vunpack.c.h.b16 %v659
        %v726 = vunpack.c.l.b16 %v660
        %v727 = vunpack.c.l.b16 %v661
        %v728 = vunpack.c.h.b16 %v661
        %v729 = vunpack.c.l.b16 %v662
        %v730 = vunpack.c.l.b16 %v663
        %v731 = vunpack.c.h.b16 %v663
        %v732 = vunpack.c.l.b16 %v664
        %v733 = vunpack.c.l.b16 %v665
        %v734 = vunpack.c.h.b16 %v665
        %v735 = vunpack.c.l.b16 %v666
        %v736 = vunpack.c.l.b16 %v667
        %v737 = vunpack.c.h.b16 %v667
        %v738 = vunpack.c.l.b16 %v668
        %v739 = vunpack.c.l.b16 %v669
        %v740 = vunpack.c.h.b16 %v669
        %v741 = vunpack.c.l.b16 %v670
        %v742 = vunpack.c.l.b16 %v671
        %v743 = vunpack.c.h.b16 %v671
        %v744 = vunpack.c.l.b16 %v672
        %v745 = vunpack.c.l.b16 %v673
        %v746 = vunpack.c.h.b16 %v673
        %v747 = vunpack.c.l.b16 %v674
        %v748 = vunpack.c.l.b16 %v675
        %v749 = vunpack.c.h.b16 %v675
        %v750 = vunpack.c.l.b16 %v676
        %v751 = vunpack.c.l.b16 %v677
        %v752 = vunpack.c.h.b16 %v677
        %v753 = vunpack.c.l.b16 %v678
        %v754 = vunpack.c.l.b16 %v679
        %v755 = vunpack.c.h.b16 %v679
        %v756 = vunpack.c.l.b16 %v680
        %v757 = vunpack.c.l.b16 %v681
        %v758 = vunpack.c.h.b16 %v681
        %v759 = vunpack.c.l.b16 %v682
        %v760 = vunpack.c.l.b16 %v683
        %v761 = vunpack.c.h.b16 %v683
        %v762 = vunpack.c.l.b16 %v684
        %v763 = vunpack.c.l.b16 %v685
        %v764 = vunpack.c.h.b16 %v685
        %v765 = vunpack.c.l.b16 %v686
        %v766 = vunpack.c.l.b16 %v687
        %v767 = vunpack.c.h.b16 %v687
        %v768 = vunpack.c.l.b16 %v688
        %v769 = vpack.c.b16 %v724, %v721
        %v770 = vpack.c.b16 %v725, %v722
        %v771 = vpack.c.b16 %v726, %v723
        %v772 = vpack.c.b16 %v730, %v727
        %v773 = vpack.c.b16 %v731, %v728
        %v774 = vpack.c.b16 %v732, %v729
        %v775 = vpack.c.b16 %v736, %v733
        %v776 = vpack.c.b16 %v737, %v734
        %v777 = vpack.c.b16 %v738, %v735
        %v778 = vpack.c.b16 %v742, %v739
        %v779 = vpack.c.b16 %v743, %v740
        %v780 = vpack.c.b16 %v744, %v741
        %v781 = vpack.c.b16 %v748, %v745
        %v782 = vpack.c.b16 %v749, %v746
        %v783 = vpack.c.b16 %v750, %v747
        %v784 = vpack.c.b16 %v754, %v751
        %v785 = vpack.c.b16 %v755, %v752
        %v786 = vpack.c.b16 %v756, %v753
        %v787 = vpack.c.b16 %v760, %v757
        %v788 = vpack.c.b16 %v761, %v758
        %v789 = vpack.c.b16 %v762, %v759
        %v790 = vpack.c.b16 %v766, %v763
        %v791 = vpack.c.b16 %v767, %v764
        %v792 = vpack.c.b16 %v768, %v765
        %817 = vmatprep.subr.bf16.mxu0 %v770
        %818 = vmatpush1.bf16.msra.mxu0 %v769
        %819 = vmatprep.subr.bf16.mxu0 %v773
        %820 = vmatpush1.bf16.msra.mxu0 %v772
        %821 = vmatprep.subr.bf16.mxu0 %v776
        %822 = vmatpush1.bf16.msra.mxu0 %v775
        %823 = vmatprep.subr.bf16.mxu0 %v779
        %824 = vmatpush1.bf16.msra.mxu0 %v778
        %825 = vmatprep.subr.bf16.mxu0 %v782
        %826 = vmatpush1.bf16.msra.mxu0 %v781
        %827 = vmatprep.subr.bf16.mxu0 %v785
        %828 = vmatpush1.bf16.msra.mxu0 %v784
        %829 = vmatprep.subr.bf16.mxu0 %v788
        %830 = vmatpush1.bf16.msra.mxu0 %v787
        %831 = vmatprep.subr.bf16.mxu0 %v791
        %832 = vmatpush1.bf16.msra.mxu0 %v790
        %833 = vmatprep.subr.bf16.mxu0 0
        %834 = vmatpush1.bf16.msra.mxu0 0
        %835 = vmatprep.subr.bf16.mxu0 0
        %836 = vmatpush1.bf16.msra.mxu0 0
        %837 = vmatprep.subr.bf16.mxu0 0
        %838 = vmatpush1.bf16.msra.mxu0 0
        %839 = vmatprep.subr.bf16.mxu0 0
        %840 = vmatpush1.bf16.msra.mxu0 0
        %841 = vmatprep.subr.bf16.mxu0 0
        %842 = vmatpush1.bf16.msra.mxu0 0
        %843 = vmatprep.subr.bf16.mxu0 0
        %844 = vmatpush1.bf16.msra.mxu0 0
        %845 = vmatprep.subr.bf16.mxu0 0
        %846 = vmatpush1.bf16.msra.mxu0 0
        %847 = vmatprep.subr.bf16.mxu0 0
        %848 = vmatpush1.bf16.msra.mxu0 0
        %849 = vmatprep.mubr.bf16.mxu0 0
        %850 = vmatmul.mubr.bf16.gmra.mrb[0].mxu0 %v656
        %v851 = vpop.f32.mrb[0].mxu0
        %v852 = vadd.f32 0.0, %v851
        %v853 = vpop.f32.mrb[0].mxu0
        %v854 = vadd.f32 0.0, %v853
        %v855 = vpop.f32.mrb[0].mxu0
        %v856 = vpop.f32.mrb[0].mxu0
        %857 = vdwg.mxu0
        %858 = vmatprep.subr.bf16.mxu0 0
        %859 = vmatpush1.bf16.msra.mxu0 %v771
        %860 = vmatprep.subr.bf16.mxu0 0
        %861 = vmatpush1.bf16.msra.mxu0 %v774
        %862 = vmatprep.subr.bf16.mxu0 0
        %863 = vmatpush1.bf16.msra.mxu0 %v777
        %864 = vmatprep.subr.bf16.mxu0 0
        %865 = vmatpush1.bf16.msra.mxu0 %v780
        %866 = vmatprep.subr.bf16.mxu0 0
        %867 = vmatpush1.bf16.msra.mxu0 %v783
        %868 = vmatprep.subr.bf16.mxu0 0
        %869 = vmatpush1.bf16.msra.mxu0 %v786
        %870 = vmatprep.subr.bf16.mxu0 0
        %871 = vmatpush1.bf16.msra.mxu0 %v789
        %872 = vmatprep.subr.bf16.mxu0 0
        %873 = vmatpush1.bf16.msra.mxu0 %v792
        %874 = vmatprep.subr.bf16.mxu0 0
        %875 = vmatpush1.bf16.msra.mxu0 0
        %876 = vmatprep.subr.bf16.mxu0 0
        %877 = vmatpush1.bf16.msra.mxu0 0
        %878 = vmatprep.subr.bf16.mxu0 0
        %879 = vmatpush1.bf16.msra.mxu0 0
        %880 = vmatprep.subr.bf16.mxu0 0
        %881 = vmatpush1.bf16.msra.mxu0 0
        %882 = vmatprep.subr.bf16.mxu0 0
        %883 = vmatpush1.bf16.msra.mxu0 0
        %884 = vmatprep.subr.bf16.mxu0 0
        %885 = vmatpush1.bf16.msra.mxu0 0
        %886 = vmatprep.subr.bf16.mxu0 0
        %887 = vmatpush1.bf16.msra.mxu0 0
        %888 = vmatprep.subr.bf16.mxu0 0
        %889 = vmatpush1.bf16.msra.mxu0 0
        %890 = vmatprep.mubr.bf16.mxu0 0
        %891 = vmatmul.mubr.bf16.gmra.mrb[0].mxu0 %v656
        %v892 = vpop.f32.mrb[0].mxu0
        %v893 = vadd.f32 0.0, %v892
        %v894 = vpop.f32.mrb[0].mxu0
        %v895 = vpop.f32.mrb[0].mxu0
        %v896 = vpop.f32.mrb[0].mxu0
        %897 = vdwg.mxu0
        %v898 = vadd.f32 %v610, %v852
        %v899 = vxor.u32 %v898, 2147483648
        %v900 = vmul.f32 %v899, 1.442695
        %v901 = vpow.pop %v900
        %v902 = vadd.f32 %v901, 1.0
        %v903 = vrcp.pop %v902
        %v904 = vmul.f32 1.0, %v903
        %v905 = vadd.f32 %v612, %v854
        %v906 = vxor.u32 %v905, 2147483648
        %v907 = vmul.f32 %v906, 1.442695
        %v908 = vpow.pop %v907
        %v909 = vadd.f32 %v908, 1.0
        %v910 = vrcp.pop %v909
        %v911 = vmul.f32 1.0, %v910
        %v912 = vld [vmem:[%s383] sm:$0x1]
        %v914 = vlaneseq
        %v915 = vshrl.u32 %v914, 7
        %v916 = vsub.s32 0, %v915
        %v917 = vrot.slane %v912, %v916
        %v919 = vadd.f32 %v893, %v917
        %v920 = vmul.f32 %v904, %v919
        %v921 = vadd.f32 %v651, %v920
        %v922 = vtanh.pop %v921
        %v923 = vsub.f32 1.0, %v911
        %v924 = vmul.f32 %v923, %v922
        %v925 = vmul.f32 %v911, %v396
        %v926 = vadd.f32 %v924, %v925
        %927 = vst [vmem:[%s387] sm:$0xff] %v926
        %928 = vst [vmem:[#allocation2] sm:$0xff] %v926
        %p929 = scmp.lt.s32.totalorder %s24, 2
        %s930 = scalar_select %p929, %s24, 2
        %s931 = smul.addr %s930, 8
        %s932 = scalar_lea.vmem %s6, %s931
        // Predicated region
        $region65: #{_stacked_gru_forward.1} parent=43 // pred_check
          %p933 = pneg %p193
        $region66: #{_stacked_gru_forward.1} parent=43 // pred_check_branch
          %935 = sbr.rel (%p933) target = $region68
        $region67: #{_stacked_gru_forward.1} parent=43 // pred_region
          _
        $region68: #{_stacked_gru_forward.1} parent=43 // pred_fallthru
          _
      $region44: #{_stacked_gru_forward.1} parent=5 // pred_fallthru
        _
      %p936 = scmp.le.s32.totalorder 2, %s19
      // Predicated region
      $region69: #{_stacked_gru_forward.1} parent=5 // pred_check
        %p937 = pneg %p936
      $region70: #{_stacked_gru_forward.1} parent=5 // pred_check_branch
        %939 = sbr.rel (%p937) target = $region72
      $region71: #{_stacked_gru_forward.1} parent=5 // pred_region
        %s940 = ssub.s32 %s19, 2
        // Predicated region
        $region73: #{_stacked_gru_forward.1} parent=71 // pred_check
          %p941 = pneg %p199
        $region74: #{_stacked_gru_forward.1} parent=71 // pred_check_branch
          %943 = sbr.rel (%p941) target = $region76
        $region75: #{_stacked_gru_forward.1} parent=71 // pred_region
          %p944 = scmp.lt.s32.totalorder %s25, 2
          %s945 = scalar_select %p944, %s25, 2
          %s946 = smul.addr %s945, 8
          %s947 = scalar_lea.vmem %s6, %s946
        $region76: #{_stacked_gru_forward.1} parent=71 // pred_fallthru
          _
      $region72: #{_stacked_gru_forward.1} parent=5 // pred_fallthru
        _
    $region6: #{_stacked_gru_forward.1} parent=1 // loop_footer
      %s23 = sadd.s32 1, %s19
    $region7: #{_stacked_gru_forward.1} parent=1 // loop_footer_branch
      %18 = sbr.rel target = $region3
    $region8: #{_stacked_gru_forward.1} parent=1 // loop_exit
      _
    %948 = vsyncpa [#allocation4], 1
    %s949 = scalar_lea.sflag [#allocation4], 1
    %950 = vsyncpa %s949, 1
    %951 = vsyncpa [#allocation6], 1
    %s952 = scalar_lea.sflag [#allocation6], 1
    %953 = vsyncpa %s952, 1
    %954 = vsyncpa [#allocation9], 1
    %s955 = scalar_lea.sflag [#allocation9], 1
    %956 = vsyncpa %s955, 1

</llo_original>
